<compile_context>
chip_gen: v7x
topology: tpu7x:2x2x1
jax: 0.10.0
libtpu: 0.0.40
codegen_flags: <defaults>
</compile_context>

<pallas_src>
import functools

import jax
import jax.numpy as jnp
from jax.experimental import pallas as pl
from jax.experimental.pallas import tpu as pltpu

D_MODEL = 32
EPS = 1e-6
PACK = 4                       # tokens packed per 128-lane row
LANES = PACK * D_MODEL         # 128
RHS_LANES = 2 * LANES          # 256: fused [W_bd | W_bd@S + S]
DEFAULT_TILE_PACKED_ROWS = 4096   # 4096 packed rows = 16384 tokens = 2 MiB f32 per block


def _round_up(x, m):
    return ((x + m - 1) // m) * m


def sublayer_kernel(x_ref, rhs_ref, s_ref, p_ref, o_ref):
    # p_ref rows: 0 = bias (tiled), 1 = bias group-sum, 2 = gain (tiled), 3 = beta (tiled)
    x = x_ref[...]                                                        # (T, 128)

    # One fused MXU product: [ x@W_bd | x@(W_bd@S + S) ]  -> (T, 256)
    prod = jnp.dot(x, rhs_ref[...], preferred_element_type=jnp.float32)

    z = prod[:, :LANES] + p_ref[0:1, :] + x                               # Wx + b + x (residual)
    grp_sum = prod[:, LANES:] + p_ref[1:2, :]                             # per-token sum, broadcast

    mean = grp_sum * (1.0 / D_MODEL)
    d = z - mean
    grp_ss = jnp.dot(d * d, s_ref[...], preferred_element_type=jnp.float32)
    std = jnp.sqrt(grp_ss * (1.0 / (D_MODEL - 1)))                        # torch unbiased std
    inv = pl.reciprocal(std + EPS, approx=True)                           # EUP slot (~free)

    o_ref[...] = p_ref[2:3, :] * d * inv + p_ref[3:4, :]


@functools.partial(jax.jit, static_argnames=("row_tile",))
def sublayer_forward(x, w, b, gain, beta, row_tile=DEFAULT_TILE_PACKED_ROWS):
    """x: (B, S, D_MODEL) float32. Returns (B, S, D_MODEL)."""
    B, S, D = x.shape
    assert D == D_MODEL
    n_tok = B * S

    # Pad tokens only up to a multiple of PACK (zero-copy when already aligned);
    # tiny-input guard keeps at least 8 packed rows so the minimum (8,128) tile is in-bounds.
    n_tok_pad = max(_round_up(n_tok, PACK), 8 * PACK)
    x2 = x.reshape(n_tok, D)
    if n_tok_pad != n_tok:
        x2 = jnp.pad(x2, ((0, n_tok_pad - n_tok), (0, 0)))
    n_packed = n_tok_pad // PACK
    xp = x2.reshape(n_packed, LANES)                    # row-major view: 4 tokens per row

    # Row tile: multiple of 8 sublanes; force >=2 grid steps (v7x dual-TC) when possible.
    tile = min(row_tile, max(8, _round_up(pl.cdiv(n_packed, 2), 8)))
    grid = (pl.cdiv(n_packed, tile),)                   # tail is a masked partial block

    # Parameters prepared once (wrapper side) for the packed layout.
    f32 = jnp.float32
    w_bd = jnp.kron(jnp.eye(PACK, dtype=f32), w.astype(f32))                    # (128,128)
    s_blk = jnp.kron(jnp.eye(PACK, dtype=f32),
                     jnp.ones((D_MODEL, D_MODEL), f32))                          # (128,128)
    rhs = jnp.concatenate(
        [w_bd,
         jnp.dot(w_bd, s_blk, precision=jax.lax.Precision.HIGHEST) + s_blk],
        axis=1)                                                                  # (128,256)
    b_t = jnp.tile(b.astype(f32), (PACK,)).reshape(1, LANES)
    bsum_t = jnp.dot(b_t, s_blk, precision=jax.lax.Precision.HIGHEST)            # (1,128)
    g_t = jnp.tile(gain.astype(f32), (PACK,)).reshape(1, LANES)
    beta_t = jnp.tile(beta.astype(f32), (PACK,)).reshape(1, LANES)
    params = jnp.concatenate(
        [b_t, bsum_t, g_t, beta_t, jnp.zeros((4, LANES), f32)], axis=0)          # (8,128)

    out = pl.pallas_call(
        sublayer_kernel,
        out_shape=jax.ShapeDtypeStruct((n_packed, LANES), f32),
        grid_spec=pl.GridSpec(
            grid=grid,
            in_specs=[
                pl.BlockSpec((tile, LANES), lambda i: (i, 0)),        # packed activations
                pl.BlockSpec((LANES, RHS_LANES), lambda i: (0, 0)),   # fused RHS (resident)
                pl.BlockSpec((LANES, LANES), lambda i: (0, 0)),       # group-sum matrix (resident)
                pl.BlockSpec((8, LANES), lambda i: (0, 0)),           # merged params (resident)
            ],
            out_specs=pl.BlockSpec((tile, LANES), lambda i: (i, 0)),
        ),
        compiler_params=pltpu.CompilerParams(
            dimension_semantics=("parallel",),        # shard grid steps across TCs (v7x)
            vmem_limit_bytes=48 * 1024 * 1024,        # 2 MiB blocks + temporaries, <64 MiB (v7x)
        ),
    )(xp, rhs, s_blk, params)

    out = out.reshape(n_tok_pad, D)[:n_tok].reshape(B, S, D)
    return out


def sublayer_reference(x, w, b, gain, beta):
    y = jnp.einsum("bsd,de->bse", x, w, precision=jax.lax.Precision.HIGHEST) + b
    z = y + x
    mean = jnp.mean(z, axis=-1, keepdims=True)
    d = z - mean
    var = jnp.sum(d * d, axis=-1, keepdims=True) / (z.shape[-1] - 1)   # torch ddof=1
    std = jnp.sqrt(var)
    return gain * d / (std + EPS) + beta


def _check(out, ref, shape, tag):
    assert out.shape == shape, (tag, out.shape)
    assert bool(jnp.all(jnp.isfinite(out))), f"{tag}: non-finite output"
    max_err = float(jnp.max(jnp.abs(out - ref)))
    # Tolerance covers MXU f32 multi-pass rounding + approx EUP reciprocal (~1e-4 rel);
    # semantic errors (ddof, residual, eps placement) would be orders of magnitude larger.
    assert jnp.allclose(out, ref, atol=3e-3, rtol=3e-3), f"{tag}: mismatch {max_err}"


if __name__ == "__main__":
    key = jax.random.PRNGKey(0)
    kx, kw, kx2, kb, kg, kbe = jax.random.split(key, 6)

    # Deterministic synthetic parameters (no checkpoint load).
    w = jax.random.normal(kw, (D_MODEL, D_MODEL), dtype=jnp.float32) * 0.02
    b = jax.random.normal(kb, (D_MODEL,), dtype=jnp.float32) * 0.01
    gain = 1.0 + 0.1 * jax.random.normal(kg, (D_MODEL,), dtype=jnp.float32)
    beta = 0.05 * jax.random.normal(kbe, (D_MODEL,), dtype=jnp.float32)

    # Test 1: small spec shape (single-block path).
    B, S = 2, 8
    x = jax.random.normal(kx, (B, S, D_MODEL), dtype=jnp.float32)
    out = jax.block_until_ready(sublayer_forward(x, w, b, gain, beta))
    _check(out, sublayer_reference(x, w, b, gain, beta), (B, S, D_MODEL), "small")

    # Test 2: multi-step grid + token count not a multiple of PACK (masked tail block path).
    B2, S2 = 3, 347     # 1041 tokens -> 261 packed rows -> grid of 2 with a partial tail
    x2 = jax.random.normal(kx2, (B2, S2, D_MODEL), dtype=jnp.float32)
    out2 = jax.block_until_ready(sublayer_forward(x2, w, b, gain, beta))
    _check(out2, sublayer_reference(x2, w, b, gain, beta), (B2, S2, D_MODEL), "tail")

    print("KERNEL_OK")
</pallas_src>

<mosaic_0001>
module attributes {stable_mosaic.version = 11 : i64} {
  func.func @sublayer_kernel(%arg0: i32, %arg1: memref<8x128xf32, #tpu.memory_space<vmem>>, %arg2: memref<128x256xf32, #tpu.memory_space<vmem>>, %arg3: memref<128x128xf32, #tpu.memory_space<vmem>>, %arg4: memref<8x128xf32, #tpu.memory_space<vmem>>, %arg5: memref<8x128xf32, #tpu.memory_space<vmem>>) attributes {dimension_semantics = [#tpu.dimension_semantics<parallel>], iteration_bounds = array<i64: 1>, scalar_prefetch = 0 : i64, scratch_operands = 0 : i64, tpu.core_type = #tpu.core_type<tc>, window_params = [{transform_indices = @transform_0, window_bounds = array<i64: 8, 128>}, {pipeline_mode = #tpu.pipeline_mode<synchronous>, transform_indices = @transform_1, window_bounds = array<i64: 128, 256>}, {pipeline_mode = #tpu.pipeline_mode<synchronous>, transform_indices = @transform_2, window_bounds = array<i64: 128, 128>}, {pipeline_mode = #tpu.pipeline_mode<synchronous>, transform_indices = @transform_3, window_bounds = array<i64: 8, 128>}, {transform_indices = @transform_4, window_bounds = array<i64: 8, 128>}]} {
    %c0 = arith.constant 0 : index
    %c0_0 = arith.constant 0 : index
    %0 = vector.load %arg1[%c0, %c0_0] : memref<8x128xf32, #tpu.memory_space<vmem>>, vector<8x128xf32>
    %c0_1 = arith.constant 0 : index
    %c0_2 = arith.constant 0 : index
    %1 = vector.load %arg2[%c0_1, %c0_2] : memref<128x256xf32, #tpu.memory_space<vmem>>, vector<128x256xf32>
    %cst = arith.constant dense<0.000000e+00> : vector<8x256xf32>
    %2 = tpu.matmul %0, %1, %cst {dimension_numbers = #tpu.dot_dimension_numbers<[1], [0], [0], [1], [0, 0, 1, 1], [], []>} : vector<8x128xf32>, vector<128x256xf32>, vector<8x256xf32> -> vector<8x256xf32>
    %3 = vector.extract_strided_slice %2 {offsets = [0, 0], sizes = [8, 128], strides = [1, 1]} : vector<8x256xf32> to vector<8x128xf32>
    %c0_3 = arith.constant 0 : index
    %c0_4 = arith.constant 0 : index
    %4 = vector.load %arg4[%c0_3, %c0_4] : memref<8x128xf32, #tpu.memory_space<vmem>>, vector<1x128xf32>
    %5 = vector.broadcast %4 : vector<1x128xf32> to vector<8x128xf32>
    %6 = arith.addf %3, %5 : vector<8x128xf32>
    %7 = arith.addf %6, %0 : vector<8x128xf32>
    %8 = vector.extract_strided_slice %2 {offsets = [0, 128], sizes = [8, 128], strides = [1, 1]} : vector<8x256xf32> to vector<8x128xf32>
    %c1 = arith.constant 1 : index
    %c0_5 = arith.constant 0 : index
    %9 = vector.load %arg4[%c1, %c0_5] : memref<8x128xf32, #tpu.memory_space<vmem>>, vector<1x128xf32>
    %10 = vector.broadcast %9 : vector<1x128xf32> to vector<8x128xf32>
    %11 = arith.addf %8, %10 : vector<8x128xf32>
    %cst_6 = arith.constant 3.125000e-02 : f32
    %12 = vector.broadcast %cst_6 : f32 to vector<8x128xf32>
    %13 = arith.mulf %11, %12 : vector<8x128xf32>
    %14 = arith.subf %7, %13 : vector<8x128xf32>
    %15 = arith.mulf %14, %14 : vector<8x128xf32>
    %c0_7 = arith.constant 0 : index
    %c0_8 = arith.constant 0 : index
    %16 = vector.load %arg3[%c0_7, %c0_8] : memref<128x128xf32, #tpu.memory_space<vmem>>, vector<128x128xf32>
    %cst_9 = arith.constant dense<0.000000e+00> : vector<8x128xf32>
    %17 = tpu.matmul %15, %16, %cst_9 {dimension_numbers = #tpu.dot_dimension_numbers<[1], [0], [0], [1], [0, 0, 1, 1], [], []>} : vector<8x128xf32>, vector<128x128xf32>, vector<8x128xf32> -> vector<8x128xf32>
    %cst_10 = arith.constant 0.0322580636 : f32
    %18 = vector.broadcast %cst_10 : f32 to vector<8x128xf32>
    %19 = arith.mulf %17, %18 : vector<8x128xf32>
    %20 = math.sqrt %19 : vector<8x128xf32>
    %cst_11 = arith.constant 9.99999997E-7 : f32
    %21 = vector.broadcast %cst_11 : f32 to vector<8x128xf32>
    %22 = arith.addf %20, %21 : vector<8x128xf32>
    %23 = tpu.reciprocal %22 {approx = true} : vector<8x128xf32> -> vector<8x128xf32>
    %c2 = arith.constant 2 : index
    %c0_12 = arith.constant 0 : index
    %24 = vector.load %arg4[%c2, %c0_12] : memref<8x128xf32, #tpu.memory_space<vmem>>, vector<1x128xf32>
    %25 = vector.broadcast %24 : vector<1x128xf32> to vector<8x128xf32>
    %26 = arith.mulf %25, %14 : vector<8x128xf32>
    %27 = arith.mulf %26, %23 : vector<8x128xf32>
    %c3 = arith.constant 3 : index
    %c0_13 = arith.constant 0 : index
    %28 = vector.load %arg4[%c3, %c0_13] : memref<8x128xf32, #tpu.memory_space<vmem>>, vector<1x128xf32>
    %29 = vector.broadcast %28 : vector<1x128xf32> to vector<8x128xf32>
    %30 = arith.addf %27, %29 : vector<8x128xf32>
    %c0_14 = arith.constant 0 : index
    %c0_15 = arith.constant 0 : index
    %31 = vector.load %arg5[%c0_14, %c0_15] : memref<8x128xf32, #tpu.memory_space<vmem>>, vector<8x128xf32>
    tpu.vector_store %arg5[%c0_14, %c0_15], %30 {strides = array<i32>} : memref<8x128xf32, #tpu.memory_space<vmem>>, vector<8x128xf32>,
    return
  }
  func.func @transform_0(%arg0: i32) -> (i32, i32) {
    %c0_i32 = arith.constant 0 : i32
    %c0_i32_0 = arith.constant 0 : i32
    return %arg0, %c0_i32 : i32, i32
  }
  func.func @transform_1(%arg0: i32) -> (i32, i32) {
    %c0_i32 = arith.constant 0 : i32
    %c0_i32_0 = arith.constant 0 : i32
    %c0_i32_1 = arith.constant 0 : i32
    return %c0_i32, %c0_i32_0 : i32, i32
  }
  func.func @transform_2(%arg0: i32) -> (i32, i32) {
    %c0_i32 = arith.constant 0 : i32
    %c0_i32_0 = arith.constant 0 : i32
    %c0_i32_1 = arith.constant 0 : i32
    return %c0_i32, %c0_i32_0 : i32, i32
  }
  func.func @transform_3(%arg0: i32) -> (i32, i32) {
    %c0_i32 = arith.constant 0 : i32
    %c0_i32_0 = arith.constant 0 : i32
    %c0_i32_1 = arith.constant 0 : i32
    return %c0_i32, %c0_i32_0 : i32, i32
  }
  func.func @transform_4(%arg0: i32) -> (i32, i32) {
    %c0_i32 = arith.constant 0 : i32
    %c0_i32_0 = arith.constant 0 : i32
    return %arg0, %c0_i32 : i32, i32
  }
}

</mosaic_0001>

<llo_original>
// kernel: tile.18
$region0: #{tile.18}
  #allocation0 [shape = 's32[1]{0}', space=sflag, size = 0x4, scoped, tag = 'scoped memory for tile.18']
  %s0 = inlined_call_operand.vmem [shape: f32[32], index: 0, kind: input, shape index: {}]
  %s1 = inlined_call_operand.vmem [shape: f32[4,32], index: 1, kind: output, shape index: {}]
  // Predicated region
  $region2: #{tile.18} parent=0 // pred_check
    _
  $region3: #{tile.18} parent=0 // pred_check_branch
    %3 = sbr.rel (0) target = $region5
  $region4: #{tile.18} parent=0 // pred_region
    _
  $region5: #{tile.18} parent=0 // pred_fallthru
    _
  %v4 = vld [vmem:[%s0] ss:$0 sm:$0xff]
  %5 = vst [vmem:[%s1] sm:$0xf] %v4

// kernel: tile.19
$region0: #{tile.19}
  %s0 = inlined_call_operand.vmem [shape: f32[4,32], index: 0, kind: input, shape index: {}]
  %s1 = inlined_call_operand.vmem [shape: f32[1,128], index: 1, kind: output, shape index: {}]
  $region1: #{tile.19} parent=0
    #allocation0 [shape = 'u8[4096]{0}', space=vmem, size = 0x1000, scoped, tag = 'scoped mem for output reshape']
    #allocation1 [shape = 'u8[4096]{0}', space=vmem, size = 0x1000, scoped, tag = 'scoped mem for input reshape']
    %s3 = sshllo.u32 0, 4
    %v4 = vld [vmem:[%s0] sm:%s3]
    %5 = vst [vmem:[#allocation1] sm:%s3] %v4
    %v6 = vld [vmem:[#allocation1] sm:$0x1]
    %vm7 = vcmask 261120
    %8 = vst.msk [vmem:[#allocation0] sm:$0x1] %vm7, %v6
    %s9 = scalar_lea.vmem [#allocation1], 3
    %v10 = vld [vmem:[%s9] sm:$0x1]
    %11 = vrot.lane.b32.xlu0 %v10, 96
    %v12 = vpop.permute.xlu0 %11
    %vm13 = vcmask 1048320
    %14 = vst.msk [vmem:[#allocation0] sm:$0x1] %vm13, %v12
    %s15 = scalar_lea.vmem [#allocation1], 2
    %v16 = vld [vmem:[%s15] sm:$0x1]
    %17 = vrot.lane.b32.xlu0 %v16, 64
    %v18 = vpop.permute.xlu0 %17
    %vm19 = vcmask 785920
    %20 = vst.msk [vmem:[#allocation0] sm:$0x1] %vm19, %v18
    %s21 = scalar_lea.vmem [#allocation1], 1
    %v22 = vld [vmem:[%s21] sm:$0x1]
    %23 = vrot.lane.b32.xlu0 %v22, 32
    %v24 = vpop.permute.xlu0 %23
    %vm25 = vcmask 523520
    %26 = vst.msk [vmem:[#allocation0] sm:$0x1] %vm25, %v24
    %s28 = sshllo.u32 0, 1
    %v30 = vld [vmem:[#allocation0] sm:%s28]
    %s31 = sshllo.u32 0, 1
    %32 = vst [vmem:[%s1] sm:%s31] %v30

// kernel: sublayer_forward.1
$region0: #{sublayer_forward.1}
  #allocation0 [shape = 'u32[]', space=smem, size = 0x4, offset = 0x4, fixed_abs, tag = 'smem constant byte address 0x4 - core index']
  #allocation1 [shape = 'u32[144,128]{1,0:T(1,128)}', space=vmem, size = 0x12000, scoped, tag = 'internal scratch']
  %s0 = inlined_call_operand.vmem [shape: f32[8,128], index: 0, kind: input, shape index: {}]
  %s1 = inlined_call_operand.vmem [shape: f32[128,256], index: 1, kind: input, shape index: {}]
  %s2 = inlined_call_operand.vmem [shape: f32[128,128], index: 2, kind: input, shape index: {}]
  %s3 = inlined_call_operand.vmem [shape: f32[8,128], index: 3, kind: input, shape index: {}]
  %s4 = inlined_call_operand.vmem [shape: f32[8,128], index: 4, kind: output, shape index: {}]
  %s5 = sld [smem:[#allocation0]]
  $region26: #{sublayer_forward.1} parent=0
    _
  %s7 = ssub.s32 1, %s5
  %s8 = scalar_select 0, %s7, %s5
  // Predicated region
  $region2: #{sublayer_forward.1} parent=0 // pred_check
    _
  $region3: #{sublayer_forward.1} parent=0 // pred_check_branch
    %10 = sbr.rel (0) target = $region5
  $region4: #{sublayer_forward.1} parent=0 // pred_region
    _
  $region5: #{sublayer_forward.1} parent=0 // pred_fallthru
    _
  // Predicated region
  $region6: #{sublayer_forward.1} parent=0 // pred_check
    _
  $region7: #{sublayer_forward.1} parent=0 // pred_check_branch
    %12 = sbr.rel (0) target = $region9
  $region8: #{sublayer_forward.1} parent=0 // pred_region
    _
  $region9: #{sublayer_forward.1} parent=0 // pred_fallthru
    _
  // Predicated region
  $region10: #{sublayer_forward.1} parent=0 // pred_check
    _
  $region11: #{sublayer_forward.1} parent=0 // pred_check_branch
    %14 = sbr.rel (0) target = $region13
  $region12: #{sublayer_forward.1} parent=0 // pred_region
    _
  $region13: #{sublayer_forward.1} parent=0 // pred_fallthru
    _
  // Predicated region
  $region14: #{sublayer_forward.1} parent=0 // pred_check
    _
  $region15: #{sublayer_forward.1} parent=0 // pred_check_branch
    %16 = sbr.rel (0) target = $region17
  $region16: #{sublayer_forward.1} parent=0 // pred_region
    _
  $region17: #{sublayer_forward.1} parent=0 // pred_fallthru
    _
  %v17 = vld [vmem:[%s0] sm:$0xff]
  %v18 = vld [vmem:[%s1] sm:$0xff]
  %v19 = vld [vmem:[%s1 + $0x8] sm:$0xff]
  %v20 = vld [vmem:[%s1 + $0x10] sm:$0xff]
  %v21 = vld [vmem:[%s1 + $0x18] sm:$0xff]
  %v22 = vld [vmem:[%s1 + $0x20] sm:$0xff]
  %v23 = vld [vmem:[%s1 + $0x28] sm:$0xff]
  %v24 = vld [vmem:[%s1 + $0x30] sm:$0xff]
  %v25 = vld [vmem:[%s1 + $0x38] sm:$0xff]
  %v26 = vld [vmem:[%s1 + $0x40] sm:$0xff]
  %v27 = vld [vmem:[%s1 + $0x48] sm:$0xff]
  %v28 = vld [vmem:[%s1 + $0x50] sm:$0xff]
  %v29 = vld [vmem:[%s1 + $0x58] sm:$0xff]
  %v30 = vld [vmem:[%s1 + $0x60] sm:$0xff]
  %v31 = vld [vmem:[%s1 + $0x68] sm:$0xff]
  %v32 = vld [vmem:[%s1 + $0x70] sm:$0xff]
  %v33 = vld [vmem:[%s1 + $0x78] sm:$0xff]
  %v34 = vld [vmem:[%s1 + $0x80] sm:$0xff]
  %v35 = vld [vmem:[%s1 + $0x88] sm:$0xff]
  %v36 = vld [vmem:[%s1 + $0x90] sm:$0xff]
  %v37 = vld [vmem:[%s1 + $0x98] sm:$0xff]
  %v38 = vld [vmem:[%s1 + $0xa0] sm:$0xff]
  %v39 = vld [vmem:[%s1 + $0xa8] sm:$0xff]
  %v40 = vld [vmem:[%s1 + $0xb0] sm:$0xff]
  %v41 = vld [vmem:[%s1 + $0xb8] sm:$0xff]
  %v42 = vld [vmem:[%s1 + $0xc0] sm:$0xff]
  %v43 = vld [vmem:[%s1 + $0xc8] sm:$0xff]
  %v44 = vld [vmem:[%s1 + $0xd0] sm:$0xff]
  %v45 = vld [vmem:[%s1 + $0xd8] sm:$0xff]
  %v46 = vld [vmem:[%s1 + $0xe0] sm:$0xff]
  %v47 = vld [vmem:[%s1 + $0xe8] sm:$0xff]
  %v48 = vld [vmem:[%s1 + $0xf0] sm:$0xff]
  %v49 = vld [vmem:[%s1 + $0xf8] sm:$0xff]
  %50 = vmatprep.subr.mxu0 %v19
  %51 = vmatpush1.msra.mxu0 %v18
  %52 = vmatprep.subr.mxu0 %v21
  %53 = vmatpush1.msra.mxu0 %v20
  %54 = vmatprep.subr.mxu0 %v23
  %55 = vmatpush1.msra.mxu0 %v22
  %56 = vmatprep.subr.mxu0 %v25
  %57 = vmatpush1.msra.mxu0 %v24
  %58 = vmatprep.subr.mxu0 %v27
  %59 = vmatpush1.msra.mxu0 %v26
  %60 = vmatprep.subr.mxu0 %v29
  %61 = vmatpush1.msra.mxu0 %v28
  %62 = vmatprep.subr.mxu0 %v31
  %63 = vmatpush1.msra.mxu0 %v30
  %64 = vmatprep.subr.mxu0 %v33
  %65 = vmatpush1.msra.mxu0 %v32
  %66 = vmatprep.subr.mxu0 %v35
  %67 = vmatpush1.msra.mxu0 %v34
  %68 = vmatprep.subr.mxu0 %v37
  %69 = vmatpush1.msra.mxu0 %v36
  %70 = vmatprep.subr.mxu0 %v39
  %71 = vmatpush1.msra.mxu0 %v38
  %72 = vmatprep.subr.mxu0 %v41
  %73 = vmatpush1.msra.mxu0 %v40
  %74 = vmatprep.subr.mxu0 %v43
  %75 = vmatpush1.msra.mxu0 %v42
  %76 = vmatprep.subr.mxu0 %v45
  %77 = vmatpush1.msra.mxu0 %v44
  %78 = vmatprep.subr.mxu0 %v47
  %79 = vmatpush1.msra.mxu0 %v46
  %80 = vmatprep.subr.mxu0 %v49
  %81 = vmatpush1.msra.mxu0 %v48
  %82 = vmatprep.subr.mxu0 0.0
  %83 = vmatpush1.msra.mxu0 0.0
  %84 = vmatprep.subr.mxu0 0.0
  %85 = vmatpush1.msra.mxu0 0.0
  %86 = vmatprep.subr.mxu0 0.0
  %87 = vmatpush1.msra.mxu0 0.0
  %88 = vmatprep.subr.mxu0 0.0
  %89 = vmatpush1.msra.mxu0 0.0
  %90 = vmatprep.subr.mxu0 0.0
  %91 = vmatpush1.msra.mxu0 0.0
  %92 = vmatprep.subr.mxu0 0.0
  %93 = vmatpush1.msra.mxu0 0.0
  %94 = vmatprep.subr.mxu0 0.0
  %95 = vmatpush1.msra.mxu0 0.0
  %96 = vmatprep.subr.mxu0 0.0
  %97 = vmatpush1.msra.mxu0 0.0
  %98 = vmatprep.subr.mxu0 0.0
  %99 = vmatpush1.msra.mxu0 0.0
  %100 = vmatprep.subr.mxu0 0.0
  %101 = vmatpush1.msra.mxu0 0.0
  %102 = vmatprep.subr.mxu0 0.0
  %103 = vmatpush1.msra.mxu0 0.0
  %104 = vmatprep.subr.mxu0 0.0
  %105 = vmatpush1.msra.mxu0 0.0
  %106 = vmatprep.subr.mxu0 0.0
  %107 = vmatpush1.msra.mxu0 0.0
  %108 = vmatprep.subr.mxu0 0.0
  %109 = vmatpush1.msra.mxu0 0.0
  %110 = vmatprep.subr.mxu0 0.0
  %111 = vmatpush1.msra.mxu0 0.0
  %112 = vmatprep.subr.mxu0 0.0
  %113 = vmatpush1.msra.mxu0 0.0
  %114 = vmatprep.mubr.f32.mxu0 0.0
  %115 = vmatmul.mubr.f32.gmra.mrb[0].mxu0 %v17
  %v116 = vpop.f32.mrb[0].mxu0
  %v117 = vadd.f32 0.0, %v116
  %v118 = vpop.f32.mrb[0].mxu0
  %v119 = vadd.f32 0.0, %v118
  %120 = vdwg.mxu0
  %v121 = vld [vmem:[%s3] sm:$0x1]
  %v122 = vlaneseq
  %v123 = vshrl.u32 %v122, 7
  %v124 = vsub.s32 0, %v123
  %v125 = vrot.slane %v121, %v124
  %v126 = vadd.f32 %v117, %v125
  %v127 = vadd.f32 %v126, %v17
  %v128 = vld [vmem:[%s3 + $0x1] sm:$0x1]
  %v129 = vlaneseq
  %v130 = vshrl.u32 %v129, 7
  %v131 = vsub.s32 0, %v130
  %v132 = vrot.slane %v128, %v131
  %v133 = vadd.f32 %v119, %v132
  %v134 = vmul.f32 %v133, 0.03125
  %v135 = vsub.f32 %v127, %v134
  %v136 = vmul.f32 %v135, %v135
  %v137 = vld [vmem:[%s2] sm:$0xff]
  %v138 = vld [vmem:[%s2 + $0x8] sm:$0xff]
  %v139 = vld [vmem:[%s2 + $0x10] sm:$0xff]
  %v140 = vld [vmem:[%s2 + $0x18] sm:$0xff]
  %v141 = vld [vmem:[%s2 + $0x20] sm:$0xff]
  %v142 = vld [vmem:[%s2 + $0x28] sm:$0xff]
  %v143 = vld [vmem:[%s2 + $0x30] sm:$0xff]
  %v144 = vld [vmem:[%s2 + $0x38] sm:$0xff]
  %v145 = vld [vmem:[%s2 + $0x40] sm:$0xff]
  %v146 = vld [vmem:[%s2 + $0x48] sm:$0xff]
  %v147 = vld [vmem:[%s2 + $0x50] sm:$0xff]
  %v148 = vld [vmem:[%s2 + $0x58] sm:$0xff]
  %v149 = vld [vmem:[%s2 + $0x60] sm:$0xff]
  %v150 = vld [vmem:[%s2 + $0x68] sm:$0xff]
  %v151 = vld [vmem:[%s2 + $0x70] sm:$0xff]
  %v152 = vld [vmem:[%s2 + $0x78] sm:$0xff]
  %153 = vmatprep.subr.mxu0 0.0
  %154 = vmatpush1.msra.mxu0 %v137
  %155 = vmatprep.subr.mxu0 0.0
  %156 = vmatpush1.msra.mxu0 %v138
  %157 = vmatprep.subr.mxu0 0.0
  %158 = vmatpush1.msra.mxu0 %v139
  %159 = vmatprep.subr.mxu0 0.0
  %160 = vmatpush1.msra.mxu0 %v140
  %161 = vmatprep.subr.mxu0 0.0
  %162 = vmatpush1.msra.mxu0 %v141
  %163 = vmatprep.subr.mxu0 0.0
  %164 = vmatpush1.msra.mxu0 %v142
  %165 = vmatprep.subr.mxu0 0.0
  %166 = vmatpush1.msra.mxu0 %v143
  %167 = vmatprep.subr.mxu0 0.0
  %168 = vmatpush1.msra.mxu0 %v144
  %169 = vmatprep.subr.mxu0 0.0
  %170 = vmatpush1.msra.mxu0 %v145
  %171 = vmatprep.subr.mxu0 0.0
  %172 = vmatpush1.msra.mxu0 %v146
  %173 = vmatprep.subr.mxu0 0.0
  %174 = vmatpush1.msra.mxu0 %v147
  %175 = vmatprep.subr.mxu0 0.0
  %176 = vmatpush1.msra.mxu0 %v148
  %177 = vmatprep.subr.mxu0 0.0
  %178 = vmatpush1.msra.mxu0 %v149
  %179 = vmatprep.subr.mxu0 0.0
  %180 = vmatpush1.msra.mxu0 %v150
  %181 = vmatprep.subr.mxu0 0.0
  %182 = vmatpush1.msra.mxu0 %v151
  %183 = vmatprep.subr.mxu0 0.0
  %184 = vmatpush1.msra.mxu0 %v152
  %185 = vmatprep.subr.mxu0 0.0
  %186 = vmatpush1.msra.mxu0 0.0
  %187 = vmatprep.subr.mxu0 0.0
  %188 = vmatpush1.msra.mxu0 0.0
  %189 = vmatprep.subr.mxu0 0.0
  %190 = vmatpush1.msra.mxu0 0.0
  %191 = vmatprep.subr.mxu0 0.0
  %192 = vmatpush1.msra.mxu0 0.0
  %193 = vmatprep.subr.mxu0 0.0
  %194 = vmatpush1.msra.mxu0 0.0
  %195 = vmatprep.subr.mxu0 0.0
  %196 = vmatpush1.msra.mxu0 0.0
  %197 = vmatprep.subr.mxu0 0.0
  %198 = vmatpush1.msra.mxu0 0.0
  %199 = vmatprep.subr.mxu0 0.0
  %200 = vmatpush1.msra.mxu0 0.0
  %201 = vmatprep.subr.mxu0 0.0
  %202 = vmatpush1.msra.mxu0 0.0
  %203 = vmatprep.subr.mxu0 0.0
  %204 = vmatpush1.msra.mxu0 0.0
  %205 = vmatprep.subr.mxu0 0.0
  %206 = vmatpush1.msra.mxu0 0.0
  %207 = vmatprep.subr.mxu0 0.0
  %208 = vmatpush1.msra.mxu0 0.0
  %209 = vmatprep.subr.mxu0 0.0
  %210 = vmatpush1.msra.mxu0 0.0
  %211 = vmatprep.subr.mxu0 0.0
  %212 = vmatpush1.msra.mxu0 0.0
  %213 = vmatprep.subr.mxu0 0.0
  %214 = vmatpush1.msra.mxu0 0.0
  %215 = vmatprep.subr.mxu0 0.0
  %216 = vmatpush1.msra.mxu0 0.0
  %217 = vmatprep.mubr.f32.mxu0 0.0
  %218 = vmatmul.mubr.f32.gmra.mrb[0].mxu0 %v136
  %v219 = vpop.f32.mrb[0].mxu0
  %v220 = vadd.f32 0.0, %v219
  %v221 = vpop.f32.mrb[0].mxu0
  %222 = vdwg.mxu0
  %v223 = vmul.f32 %v220, 0.032258064
  %v224 = vrsqrt.pop %v223
  %v225 = vmul.f32 %v223, %v224
  %vm226 = vcmp.eq.f32.partialorder %v223, inf
  %v227 = vsel %vm226, %v223, %v225
  %vm228 = vcmp.eq.f32.partialorder %v223, 0.0
  %v229 = vand.u32 %v223, 2147483648
  %v230 = vsel %vm228, %v229, %v227
  %v231 = vadd.f32 %v230, 1e-06
  %v232 = vrcp.pop %v231
  %v233 = vld [vmem:[%s3 + $0x2] sm:$0x1]
  %v234 = vlaneseq
  %v235 = vshrl.u32 %v234, 7
  %v236 = vsub.s32 0, %v235
  %v237 = vrot.slane %v233, %v236
  %v238 = vmul.f32 %v237, %v135
  %v239 = vmul.f32 %v238, %v232
  %v240 = vld [vmem:[%s3 + $0x3] sm:$0x1]
  %v241 = vlaneseq
  %v242 = vshrl.u32 %v241, 7
  %v243 = vsub.s32 0, %v242
  %v244 = vrot.slane %v240, %v243
  %v245 = vadd.f32 %v239, %v244
  %246 = vst [vmem:[%s4] sm:$0xff] %v245
  // Predicated region
  $region18: #{sublayer_forward.1} parent=0 // pred_check
    _
  $region19: #{sublayer_forward.1} parent=0 // pred_check_branch
    %248 = sbr.rel (0) target = $region21
  $region20: #{sublayer_forward.1} parent=0 // pred_region
    _
  $region21: #{sublayer_forward.1} parent=0 // pred_fallthru
    _
  // Predicated region
  $region22: #{sublayer_forward.1} parent=0 // pred_check
    _
  $region23: #{sublayer_forward.1} parent=0 // pred_check_branch
    %250 = sbr.rel (0) target = $region25
  $region24: #{sublayer_forward.1} parent=0 // pred_region
    _
  $region25: #{sublayer_forward.1} parent=0 // pred_fallthru
    _

</llo_original>
